<compile_context>
chip_gen: v6e
topology: v6e:2x2x1
jax: 0.10.0
libtpu: 0.0.40
codegen_flags: <defaults>
</compile_context>

<pallas_src>
import functools

import jax
import jax.numpy as jnp
from jax.experimental import pallas as pl
from jax.experimental.pallas import tpu as pltpu

T_CHUNK = 16                    # timesteps per grid step in the recurrence
VMEM_LIMIT = 64 * 1024 * 1024   # explicit scoped-VMEM budget (fits v7x's 64MiB)


def _round_up(x, m):
    return ((x + m - 1) // m) * m


# ---------------------------------------------------------------------------
# Tiled linear kernel: out = x @ W + b  (bf16 operands, f32 accumulate).
# Used for the hoisted LSTM input projections and the final vocab projection.
# Both grid axes are 'parallel' so v7x can split across TensorCores.
# TODO(synk): for very large K*tile_n add an 'arbitrary' K-reduction grid axis
# with an f32 VMEM accumulator instead of loading full-K blocks.
# ---------------------------------------------------------------------------
def _linear_kernel(x_ref, w_ref, b_ref, o_ref):
    acc = jnp.dot(x_ref[...], w_ref[...], preferred_element_type=jnp.float32)
    o_ref[...] = (acc + b_ref[...]).astype(o_ref.dtype)


def linear(x, w, b, *, out_dtype=jnp.float32, tile_m=256, tile_n=1024):
    M, K = x.shape
    _, N = w.shape
    tm = min(tile_m, M)
    tn = min(tile_n, N)
    return pl.pallas_call(
        _linear_kernel,
        out_shape=jax.ShapeDtypeStruct((M, N), out_dtype),
        grid_spec=pltpu.PrefetchScalarGridSpec(
            num_scalar_prefetch=0,
            grid=(pl.cdiv(M, tm), pl.cdiv(N, tn)),
            in_specs=[
                pl.BlockSpec((tm, K), lambda i, j: (i, 0)),
                pl.BlockSpec((K, tn), lambda i, j: (0, j)),
                pl.BlockSpec((1, tn), lambda i, j: (0, j)),
            ],
            out_specs=pl.BlockSpec((tm, tn), lambda i, j: (i, j)),
        ),
        compiler_params=pltpu.CompilerParams(
            dimension_semantics=("parallel", "parallel"),
            vmem_limit_bytes=VMEM_LIMIT),
    )(x, w, b)


# ---------------------------------------------------------------------------
# Recurrent LSTM kernel (fused gates, time-major).
#   xz_ref  : [t_chunk, b_tile, 4H]  bf16 precomputed x @ W_ih + b
#   whh_ref : [H, 4H]                bf16 recurrent weights (one matmul/step)
# Grid = (batch tiles 'parallel', time chunks 'arbitrary').  h/c live in VMEM
# scratch across time steps and are re-seeded at time step 0 of each batch
# tile.  Per-step hidden states are stored time-major (contiguous tiles).
# ---------------------------------------------------------------------------
def _lstm_kernel(xz_ref, h0_ref, c0_ref, whh_ref,
                 out_ref, hT_ref, cT_ref, h_sc, c_sc,
                 *, t_chunk, t_real, apply_mask):
    t_step = pl.program_id(1)

    @pl.when(t_step == 0)
    def _():
        h_sc[...] = h0_ref[...]
        c_sc[...] = c0_ref[...]

    h = h_sc[...]
    c = c_sc[...]
    w = whh_ref[...]                       # [H, 4H] bf16
    H = h0_ref.shape[-1]

    for tl in range(t_chunk):              # static unroll (ld/st indices static)
        # One fused MXU push: [b_tile, H] @ [H, 4H] -> f32
        z = xz_ref[tl] + jnp.dot(h.astype(jnp.bfloat16), w,
                                 preferred_element_type=jnp.float32)
        i_gate = jax.nn.sigmoid(z[:, 0:H])
        f_gate = jax.nn.sigmoid(z[:, H:2 * H])
        g_gate = jnp.tanh(z[:, 2 * H:3 * H])
        o_gate = jax.nn.sigmoid(z[:, 3 * H:4 * H])

        c_new = f_gate * c + i_gate * g_gate
        h_new = o_gate * jnp.tanh(c_new)

        if apply_mask:                     # only emitted when T was padded
            valid = (t_step * t_chunk + tl) < t_real
            h = jnp.where(valid, h_new, h)
            c = jnp.where(valid, c_new, c)
        else:
            h, c = h_new, c_new

        out_ref[tl] = h                    # contiguous time-major store

    h_sc[...] = h
    c_sc[...] = c

    @pl.when(t_step == pl.num_programs(1) - 1)
    def _():
        hT_ref[...] = h
        cT_ref[...] = c


def lstm_forward(x_tbd, h0, c0, w_ih, w_hh, b, *,
                 t_chunk=T_CHUNK, b_tile_max=128):
    """x_tbd: [T, B, D] time-major.  Weights bf16: w_ih [D,4H], w_hh [H,4H].
    Returns (out [T_pad, B_pad, H] f32, h_T [B_pad, H], c_T [B_pad, H])."""
    T, B, D = x_tbd.shape
    H = h0.shape[-1]

    t_chunk = max(1, min(t_chunk, T))
    T_pad = _round_up(T, t_chunk)
    B_pad = _round_up(max(B, 8), 8)        # f32 sublane fill
    b_tile = min(B_pad, b_tile_max)
    B_pad = _round_up(B_pad, b_tile)

    # Pad once on the narrow input, then the projection GEMM writes xz directly
    # in the padded time-major layout (no post-GEMM transpose / pad passes).
    x_p = jnp.pad(x_tbd, ((0, T_pad - T), (0, B_pad - B), (0, 0)))
    xz = linear(x_p.reshape(T_pad * B_pad, D).astype(jnp.bfloat16),
                w_ih, b, out_dtype=jnp.bfloat16)          # [T_pad*B_pad, 4H]
    xz = xz.reshape(T_pad, B_pad, 4 * H)                  # free reshape

    h0p = jnp.pad(h0, ((0, B_pad - B), (0, 0)))
    c0p = jnp.pad(c0, ((0, B_pad - B), (0, 0)))

    kernel = functools.partial(_lstm_kernel, t_chunk=t_chunk, t_real=T,
                               apply_mask=(T_pad != T))
    out, hT, cT = pl.pallas_call(
        kernel,
        out_shape=(
            jax.ShapeDtypeStruct((T_pad, B_pad, H), jnp.float32),
            jax.ShapeDtypeStruct((B_pad, H), jnp.float32),
            jax.ShapeDtypeStruct((B_pad, H), jnp.float32),
        ),
        grid_spec=pltpu.PrefetchScalarGridSpec(
            num_scalar_prefetch=0,
            grid=(B_pad // b_tile, T_pad // t_chunk),
            in_specs=[
                pl.BlockSpec((t_chunk, b_tile, 4 * H), lambda bi, ti: (ti, bi, 0)),
                pl.BlockSpec((b_tile, H), lambda bi, ti: (bi, 0)),   # h0
                pl.BlockSpec((b_tile, H), lambda bi, ti: (bi, 0)),   # c0
                pl.BlockSpec((H, 4 * H), lambda bi, ti: (0, 0)),     # W_hh (fused)
            ],
            out_specs=(
                pl.BlockSpec((t_chunk, b_tile, H), lambda bi, ti: (ti, bi, 0)),
                pl.BlockSpec((b_tile, H), lambda bi, ti: (bi, 0)),
                pl.BlockSpec((b_tile, H), lambda bi, ti: (bi, 0)),
            ),
            scratch_shapes=[pltpu.VMEM((b_tile, H), jnp.float32)] * 2,
        ),
        compiler_params=pltpu.CompilerParams(
            dimension_semantics=("parallel", "arbitrary"),
            vmem_limit_bytes=VMEM_LIMIT),
    )(xz, h0p, c0p, w_hh)
    return out, hT, cT


# ---------------------------------------------------------------------------
# Attention kernel (time-major encoder outputs):
#   scores[t,b] = sum_h enc[t,b,h] * h_dec[b,h]   (VPU mult + lane reduce)
#   softmax over t (padded steps masked), EUP approx reciprocal
#   ctx[b,h]    = sum_t w[t,b] * enc[t,b,h]       (VPU mult + time-axis sum)
# Whole batch in one tile (tiny VMEM footprint per the review).
# ---------------------------------------------------------------------------
def _attention_kernel(enc_ref, h_ref, ctx_ref, *, t_real, apply_mask):
    enc = enc_ref[...]                                  # [T_pad, B, H]
    h = h_ref[...]                                      # [B, H]
    scores = jnp.sum(enc * h[None, :, :], axis=-1)      # [T_pad, B]
    if apply_mask:
        t_idx = jax.lax.broadcasted_iota(jnp.int32, scores.shape, 0)
        scores = jnp.where(t_idx < t_real, scores, -jnp.inf)
    m = jnp.max(scores, axis=0, keepdims=True)
    e = jnp.exp(scores - m)
    denom = jnp.sum(e, axis=0, keepdims=True)
    w = e * pl.reciprocal(denom, approx=True)            # softmax over time
    ctx_ref[...] = jnp.sum(enc * w[:, :, None], axis=0)  # [B, H]


def attention(enc_out_p, h, *, t_real):
    T_pad, B_pad, H = enc_out_p.shape
    kernel = functools.partial(_attention_kernel, t_real=t_real,
                               apply_mask=(T_pad != t_real))
    return pl.pallas_call(
        kernel,
        out_shape=jax.ShapeDtypeStruct((B_pad, H), jnp.float32),
        grid_spec=pltpu.PrefetchScalarGridSpec(
            num_scalar_prefetch=0,
            grid=(1,),
            in_specs=[
                pl.BlockSpec((T_pad, B_pad, H), lambda i: (0, 0, 0)),
                pl.BlockSpec((B_pad, H), lambda i: (0, 0)),
            ],
            out_specs=pl.BlockSpec((B_pad, H), lambda i: (0, 0)),
        ),
        compiler_params=pltpu.CompilerParams(
            dimension_semantics=("parallel",),
            vmem_limit_bytes=VMEM_LIMIT),
    )(enc_out_p, h)


# ---------------------------------------------------------------------------
# Parameters (deterministic init, PyTorch-like uniform scaling).
# Matmul weights stored bf16 (native MXU path); biases / embedding stay f32.
# Gate order (i, f, g, o); b = b_ih + b_hh; weights pre-transposed [in, 4H].
# ---------------------------------------------------------------------------
def init_params(key, vocab_size, embedding_dim, hidden_size):
    ks = jax.random.split(key, 11)
    H = hidden_size
    s = 1.0 / float(H) ** 0.5

    def u(k, shape):
        return jax.random.uniform(k, shape, jnp.float32, -s, s)

    return dict(
        embedding=jax.random.normal(ks[0], (vocab_size, embedding_dim),
                                    jnp.float32),
        enc_w_ih=u(ks[1], (embedding_dim, 4 * H)).astype(jnp.bfloat16),
        enc_w_hh=u(ks[2], (H, 4 * H)).astype(jnp.bfloat16),
        enc_b=u(ks[3], (1, 4 * H)) + u(ks[4], (1, 4 * H)),
        dec_w_ih=u(ks[5], (embedding_dim + H, 4 * H)).astype(jnp.bfloat16),
        dec_w_hh=u(ks[6], (H, 4 * H)).astype(jnp.bfloat16),
        dec_b=u(ks[7], (1, 4 * H)) + u(ks[8], (1, 4 * H)),
        fc_w=u(ks[9], (H, vocab_size)).astype(jnp.bfloat16),
        fc_b=u(ks[10], (1, vocab_size)),
    )


# ---------------------------------------------------------------------------
# Full forward pass (time-major internally; returns [B, Tt, V] like PyTorch).
# Attention is computed ONCE from the final encoder hidden state and the
# context is broadcast to every decoder step — exactly as in the reference.
# ---------------------------------------------------------------------------
def seq2seq_forward(params, src, trg, hidden_size):
    emb = params['embedding']                 # [V, E] f32
    B, Ts = src.shape
    Tt = trg.shape[1]
    H = hidden_size
    V, E = emb.shape

    # TODO(synk): token-embedding gather stays in XLA (no clean small-shape
    # Pallas gather).  Gathered directly into time-major layout (free).
    emb_src = emb[src.T]                      # [Ts, B, E]
    emb_trg = emb[trg.T]                      # [Tt, B, E]

    h0 = jnp.zeros((B, H), jnp.float32)
    c0 = jnp.zeros((B, H), jnp.float32)

    # Encoder LSTM.
    enc_out, h_enc, c_enc = lstm_forward(
        emb_src, h0, c0,
        params['enc_w_ih'], params['enc_w_hh'], params['enc_b'])
    # enc_out: [Ts_pad, B_pad, H];  h_enc / c_enc: [B_pad, H]

    # Dot attention over encoder outputs with the final encoder hidden state.
    ctx = attention(enc_out, h_enc, t_real=Ts)            # [B_pad, H]
    ctx_b = ctx[:B]

    # Decoder LSTM on [embedded_trg ; context] with encoder's (h, c).
    dec_in = jnp.concatenate(
        [emb_trg, jnp.broadcast_to(ctx_b[None, :, :], (Tt, B, H))], axis=2)
    dec_out, _, _ = lstm_forward(
        dec_in, h_enc[:B], c_enc[:B],
        params['dec_w_ih'], params['dec_w_hh'], params['dec_b'])
    Tt_pad, B_pad, _ = dec_out.shape

    # Final projection to vocabulary (tiled bf16 MXU GEMM), then slice off the
    # padding and transpose back to batch-major for the PyTorch-style output.
    logits = linear(dec_out.reshape(Tt_pad * B_pad, H).astype(jnp.bfloat16),
                    params['fc_w'], params['fc_b'], out_dtype=jnp.float32)
    logits = logits.reshape(Tt_pad, B_pad, V)[:Tt, :B]
    return jnp.transpose(logits, (1, 0, 2))               # [B, Tt, V]


if __name__ == "__main__":
    vocab_size = 32
    embedding_dim = 16
    hidden_size = 32
    batch = 2
    src_len = 8
    trg_len = 8

    key = jax.random.PRNGKey(0)
    k_params, k_src, k_trg = jax.random.split(key, 3)
    params = init_params(k_params, vocab_size, embedding_dim, hidden_size)

    src = jax.random.randint(k_src, (batch, src_len), 0, vocab_size, jnp.int32)
    trg = jax.random.randint(k_trg, (batch, trg_len), 0, vocab_size, jnp.int32)

    out = seq2seq_forward(params, src, trg, hidden_size)
    out = jax.block_until_ready(out)
    assert out.shape == (batch, trg_len, vocab_size)
    assert bool(jnp.all(jnp.isfinite(out)))
    print("KERNEL_OK")
</pallas_src>

<mosaic_0001>
module attributes {stable_mosaic.version = 11 : i64} {
  func.func @_linear_kernel(%arg0: i32, %arg1: i32, %arg2: memref<64x16xbf16, #tpu.memory_space<vmem>>, %arg3: memref<16x128xbf16, #tpu.memory_space<vmem>>, %arg4: memref<1x128xf32, #tpu.memory_space<vmem>>, %arg5: memref<64x128xbf16, #tpu.memory_space<vmem>>) attributes {dimension_semantics = [#tpu.dimension_semantics<parallel>, #tpu.dimension_semantics<parallel>], iteration_bounds = array<i64: 1, 1>, scalar_prefetch = 0 : i64, scratch_operands = 0 : i64, tpu.core_type = #tpu.core_type<tc>, window_params = [{transform_indices = @transform_0, window_bounds = array<i64: 64, 16>}, {transform_indices = @transform_1, window_bounds = array<i64: 16, 128>}, {transform_indices = @transform_2, window_bounds = array<i64: 1, 128>}, {transform_indices = @transform_3, window_bounds = array<i64: 64, 128>}]} {
    %c0 = arith.constant 0 : index
    %c0_0 = arith.constant 0 : index
    %0 = vector.load %arg2[%c0, %c0_0] : memref<64x16xbf16, #tpu.memory_space<vmem>>, vector<64x16xbf16>
    %c0_1 = arith.constant 0 : index
    %c0_2 = arith.constant 0 : index
    %1 = vector.load %arg3[%c0_1, %c0_2] : memref<16x128xbf16, #tpu.memory_space<vmem>>, vector<16x128xbf16>
    %cst = arith.constant dense<0.000000e+00> : vector<64x128xf32>
    %2 = tpu.matmul %0, %1, %cst {dimension_numbers = #tpu.dot_dimension_numbers<[1], [0], [0], [1], [0, 0, 1, 1], [], []>} : vector<64x16xbf16>, vector<16x128xbf16>, vector<64x128xf32> -> vector<64x128xf32>
    %c0_3 = arith.constant 0 : index
    %c0_4 = arith.constant 0 : index
    %3 = vector.load %arg4[%c0_3, %c0_4] : memref<1x128xf32, #tpu.memory_space<vmem>>, vector<1x128xf32>
    %4 = vector.broadcast %3 : vector<1x128xf32> to vector<64x128xf32>
    %5 = arith.addf %2, %4 : vector<64x128xf32>
    %6 = arith.truncf %5 : vector<64x128xf32> to vector<64x128xbf16>
    %c0_5 = arith.constant 0 : index
    %c0_6 = arith.constant 0 : index
    %7 = vector.load %arg5[%c0_5, %c0_6] : memref<64x128xbf16, #tpu.memory_space<vmem>>, vector<64x128xbf16>
    tpu.vector_store %arg5[%c0_5, %c0_6], %6 {strides = array<i32>} : memref<64x128xbf16, #tpu.memory_space<vmem>>, vector<64x128xbf16>,
    return
  }
  func.func @transform_0(%arg0: i32, %arg1: i32) -> (i32, i32) {
    %c0_i32 = arith.constant 0 : i32
    %c0_i32_0 = arith.constant 0 : i32
    return %arg0, %c0_i32 : i32, i32
  }
  func.func @transform_1(%arg0: i32, %arg1: i32) -> (i32, i32) {
    %c0_i32 = arith.constant 0 : i32
    %c0_i32_0 = arith.constant 0 : i32
    return %c0_i32, %arg1 : i32, i32
  }
  func.func @transform_2(%arg0: i32, %arg1: i32) -> (i32, i32) {
    %c0_i32 = arith.constant 0 : i32
    %c0_i32_0 = arith.constant 0 : i32
    return %c0_i32, %arg1 : i32, i32
  }
  func.func @transform_3(%arg0: i32, %arg1: i32) -> (i32, i32) {
    %c0_i32 = arith.constant 0 : i32
    return %arg0, %arg1 : i32, i32
  }
}

</mosaic_0001>

<llo_original>
// kernel: tpu_custom_call.1
$region0: #{tpu_custom_call.1}
  #allocation0 [shape = 'u32[]', space=smem, size = 0x4, offset = 0x4, fixed_abs, tag = 'smem constant byte address 0x4 - core index']
  #allocation1 [shape = 'u32[144,128]{1,0:T(1,128)}', space=vmem, size = 0x12000, scoped, tag = 'internal scratch']
  %s0 = inlined_call_operand.vmem [shape: bf16[64,16], index: 0, kind: input, shape index: {}]
  %s1 = inlined_call_operand.vmem [shape: bf16[16,128], index: 1, kind: input, shape index: {}]
  %s2 = inlined_call_operand.vmem [shape: f32[1,128], index: 2, kind: input, shape index: {}]
  %s3 = inlined_call_operand.hbm [shape: bf16[64,128], index: 3, kind: output, shape index: {}]
  %s4 = sld [smem:[#allocation0]]
  $region22: #{tpu_custom_call.1} parent=0
    _
  %s6 = ssub.s32 1, %s4
  %s7 = scalar_select 0, %s6, %s4
  $region1: #{tpu_custom_call.1} parent=0
    #allocation2 [shape = 'u8[16384]{0}', space=vmem, size = 0x4000, scoped, tag = 'output window, operand 0, single buffered']
    #allocation3 [shape = 's32[1]{0}', space=sflag, size = 0x4, scoped, tag = 'scoped memory for tpu_custom_call.1']
    %8 = vsyncpa [#allocation3], 0
    // Predicated region
    $region2: #{tpu_custom_call.1} parent=1 // pred_check
      _
    $region3: #{tpu_custom_call.1} parent=1 // pred_check_branch
      %10 = sbr.rel (0) target = $region5
    $region4: #{tpu_custom_call.1} parent=1 // pred_region
      _
    $region5: #{tpu_custom_call.1} parent=1 // pred_fallthru
      _
    // Predicated region
    $region6: #{tpu_custom_call.1} parent=1 // pred_check
      _
    $region7: #{tpu_custom_call.1} parent=1 // pred_check_branch
      %12 = sbr.rel (0) target = $region9
    $region8: #{tpu_custom_call.1} parent=1 // pred_region
      _
    $region9: #{tpu_custom_call.1} parent=1 // pred_fallthru
      _
    // Predicated region
    $region10: #{tpu_custom_call.1} parent=1 // pred_check
      _
    $region11: #{tpu_custom_call.1} parent=1 // pred_check_branch
      %14 = sbr.rel (0) target = $region13
    $region12: #{tpu_custom_call.1} parent=1 // pred_region
      _
    $region13: #{tpu_custom_call.1} parent=1 // pred_fallthru
      _
    %v16 = vld [vmem:[%s0] sm:$0xf]
    %v17 = vld [vmem:[%s0 + $0x4] sm:$0xf]
    %v18 = vld [vmem:[%s0 + $0x8] sm:$0xf]
    %v19 = vld [vmem:[%s0 + $0xc] sm:$0xf]
    %v20 = vld [vmem:[%s0 + $0x10] sm:$0xf]
    %v21 = vld [vmem:[%s0 + $0x14] sm:$0xf]
    %v22 = vld [vmem:[%s0 + $0x18] sm:$0xf]
    %v23 = vld [vmem:[%s0 + $0x1c] sm:$0xf]
    %v24 = vld [vmem:[%s1] sm:$0xf]
    %v25 = vld [vmem:[%s1 + $0x4] sm:$0xf]
    %v26 = vld [vmem:[%s2] sm:$0x1]
    %v28 = vlaneseq
    %v29 = vshrl.u32 %v28, 7
    %v30 = vsub.s32 0, %v29
    %v31 = vrot.slane %v26, %v30
    %v41 = vunpack.c.l.b16 %v16
    %v42 = vunpack.c.l.b16 %v17
    %v43 = vunpack.c.l.b16 %v18
    %v44 = vunpack.c.l.b16 %v19
    %v45 = vunpack.c.l.b16 %v20
    %v46 = vunpack.c.l.b16 %v21
    %v47 = vunpack.c.l.b16 %v22
    %v48 = vunpack.c.l.b16 %v23
    %v49 = vpack.c.b16 %v42, %v41
    %v50 = vpack.c.b16 %v44, %v43
    %v51 = vpack.c.b16 %v46, %v45
    %v52 = vpack.c.b16 %v48, %v47
    %v55 = vunpack.c.l.b16 %v24
    %v56 = vunpack.c.l.b16 %v25
    %v57 = vpack.c.b16 %v56, %v55
    %vm59 = vcmask 130048
    %v61 = vsel %vm59, %v49, 0
    %v64 = vsel %vm59, %v50, 0
    %v67 = vsel %vm59, %v51, 0
    %v70 = vsel %vm59, %v52, 0
    %72 = vmatprep.subr.bf16.mxu0 0
    %73 = vmatpush1.bf16.msra.mxu0 0
    %74 = vmatprep.subr.bf16.mxu0 0
    %75 = vmatpush1.bf16.msra.mxu0 0
    %76 = vmatprep.subr.bf16.mxu0 0
    %77 = vmatpush1.bf16.msra.mxu0 0
    %78 = vmatprep.subr.bf16.mxu0 0
    %79 = vmatpush1.bf16.msra.mxu0 0
    %80 = vmatprep.subr.bf16.mxu0 0
    %81 = vmatpush1.bf16.msra.mxu0 0
    %82 = vmatprep.subr.bf16.mxu0 0
    %83 = vmatpush1.bf16.msra.mxu0 0
    %84 = vmatprep.subr.bf16.mxu0 0
    %85 = vmatpush1.bf16.msra.mxu0 0
    %86 = vmatprep.subr.bf16.mxu0 0
    %87 = vmatpush1.bf16.msra.mxu0 %v57
    %88 = vmatprep.subr.bf16.mxu0 0
    %89 = vmatpush2.bf16.msra.mxu0 0
    %90 = vmatprep.subr.bf16.mxu0 0
    %91 = vmatpush2.bf16.msra.mxu0 0
    %92 = vmatprep.subr.bf16.mxu0 0
    %93 = vmatpush2.bf16.msra.mxu0 0
    %94 = vmatprep.subr.bf16.mxu0 0
    %95 = vmatpush2.bf16.msra.mxu0 0
    %96 = vmatprep.subr.bf16.mxu0 0
    %97 = vmatpush2.bf16.msra.mxu0 0
    %98 = vmatprep.subr.bf16.mxu0 0
    %99 = vmatpush2.bf16.msra.mxu0 0
    %100 = vmatprep.subr.bf16.mxu0 0
    %101 = vmatpush2.bf16.msra.mxu0 0
    %102 = vmatprep.subr.bf16.mxu0 0
    %103 = vmatpush2.bf16.msra.mxu0 0
    %104 = vmatprep.mubr.bf16.mxu0 0
    %105 = vmatmul.mubr.bf16.gmra.mxu0 %v61
    %v106 = vpop.f32.mrf.mxu0
    %v107 = vadd.f32 %v31, %v106
    %v108 = vpop.f32.mrf.mxu0
    %v109 = vpop.f32.mrf.mxu0
    %v110 = vadd.f32 %v31, %v109
    %v111 = vpop.f32.mrf.mxu0
    %112 = vmatprep.mubr.bf16.mxu0 0
    %113 = vmatmul.mubr.bf16.gmra.mxu0 %v64
    %v114 = vpop.f32.mrf.mxu0
    %v115 = vadd.f32 %v31, %v114
    %v116 = vpop.f32.mrf.mxu0
    %v117 = vpop.f32.mrf.mxu0
    %v118 = vadd.f32 %v31, %v117
    %v119 = vpop.f32.mrf.mxu0
    %120 = vmatprep.mubr.bf16.mxu0 0
    %121 = vmatmul.mubr.bf16.gmra.mxu0 %v67
    %v122 = vpop.f32.mrf.mxu0
    %v123 = vadd.f32 %v31, %v122
    %v124 = vpop.f32.mrf.mxu0
    %v125 = vpop.f32.mrf.mxu0
    %v126 = vadd.f32 %v31, %v125
    %v127 = vpop.f32.mrf.mxu0
    %128 = vmatprep.mubr.bf16.mxu0 0
    %129 = vmatmul.mubr.bf16.gmra.mxu0 %v70
    %v130 = vpop.f32.mrf.mxu0
    %v131 = vadd.f32 %v31, %v130
    %v132 = vpop.f32.mrf.mxu0
    %v133 = vpop.f32.mrf.mxu0
    %v134 = vadd.f32 %v31, %v133
    %v135 = vpop.f32.mrf.mxu0
    %136 = vdwg.mxu0
    %v137 = vpack.c.bf16 %v110, %v107
    %v138 = vpack.c.bf16 %v118, %v115
    %v139 = vpack.c.bf16 %v126, %v123
    %v140 = vpack.c.bf16 %v134, %v131
    %v145 = vunpack.c.l.b16 %v137
    %v146 = vunpack.c.h.b16 %v137
    %v147 = vunpack.c.l.b16 %v138
    %v148 = vunpack.c.h.b16 %v138
    %v149 = vunpack.c.l.b16 %v139
    %v150 = vunpack.c.h.b16 %v139
    %v151 = vunpack.c.l.b16 %v140
    %v152 = vunpack.c.h.b16 %v140
    %v153 = vpack.c.b16 %v145, %v145
    %v154 = vpack.c.b16 %v146, %v146
    %v155 = vpack.c.b16 %v147, %v147
    %v156 = vpack.c.b16 %v148, %v148
    %v157 = vpack.c.b16 %v149, %v149
    %v158 = vpack.c.b16 %v150, %v150
    %v159 = vpack.c.b16 %v151, %v151
    %v160 = vpack.c.b16 %v152, %v152
    %169 = vst [vmem:[#allocation2] sm:$0xf] %v153
    %170 = vst [vmem:[#allocation2 + $0x4] sm:$0xf] %v154
    %171 = vst [vmem:[#allocation2 + $0x8] sm:$0xf] %v155
    %172 = vst [vmem:[#allocation2 + $0xc] sm:$0xf] %v156
    %173 = vst [vmem:[#allocation2 + $0x10] sm:$0xf] %v157
    %174 = vst [vmem:[#allocation2 + $0x14] sm:$0xf] %v158
    %175 = vst [vmem:[#allocation2 + $0x18] sm:$0xf] %v159
    %176 = vst [vmem:[#allocation2 + $0x1c] sm:$0xf] %v160
    // Predicated region
    $region14: #{tpu_custom_call.1} parent=1 // pred_check
      _
    $region15: #{tpu_custom_call.1} parent=1 // pred_check_branch
      %178 = sbr.rel (0) target = $region17
    $region16: #{tpu_custom_call.1} parent=1 // pred_region
      %s180 = ssub.s32 512, 512
      %181 = vsyncadd [#allocation3], %s180
      %s182 = sshll.u32 [#allocation2], 4
      %s183 = int_to_ptr.vmem [resolvable:$true] %s182
      %188 = dma.vmem_to_hbm [thread:$0]  %s183, 512, %s3, [#allocation3], 64, 64, 4
    $region17: #{tpu_custom_call.1} parent=1 // pred_fallthru
      _
    // Predicated region
    $region18: #{tpu_custom_call.1} parent=1 // pred_check
      _
    $region19: #{tpu_custom_call.1} parent=1 // pred_check_branch
      %190 = sbr.rel (0) target = $region21
    $region20: #{tpu_custom_call.1} parent=1 // pred_region
      %191 = dma.done [#allocation3], 512
    $region21: #{tpu_custom_call.1} parent=1 // pred_fallthru
      _
    %192 = vsyncpa [#allocation3], 1

</llo_original>
